<compile_context>
chip_gen: v5e
topology: v5e:2x2
jax: 0.10.0
libtpu: 0.0.40
codegen_flags: <defaults>
</compile_context>

<pallas_src>
import functools

import jax
import jax.numpy as jnp
from jax.experimental import pallas as pl
from jax.experimental.pallas import tpu as pltpu

_LANE = 128
_SUBLANE = 8


def _round_up(x, m):
    return ((x + m - 1) // m) * m


def _latent_mlp_kernel(z_ref, a_ref, w1z_ref, w1a_ref, b1_ref, w2_ref, b2_ref, o_ref):
    # z_ref: (tb, Zdim) f32   a_ref: (tb, nu) f32
    # w1z_ref: (Zdim, Hp) bf16   w1a_ref: (nu, Hp) f32   b1_ref: (1, Hp) f32
    # w2_ref: (Hp, out_dim) bf16   b2_ref: (1, out_dim) f32   o_ref: (tb, out_dim)
    # MXU matmul in bf16 with f32 accumulation.
    h = jnp.dot(z_ref[...].astype(jnp.bfloat16), w1z_ref[...],
                preferred_element_type=jnp.float32)
    # K=2 action contraction as an unrolled VPU outer-product accumulate (f32).
    a = a_ref[...]
    for j in range(a.shape[1]):                     # nu is static (=2): unrolled
        h = h + a[:, j:j + 1] * w1a_ref[j:j + 1, :]
    h = jnp.maximum(h + b1_ref[...], 0.0)           # f32 bias + ReLU on the VPU
    out = jnp.dot(h.astype(jnp.bfloat16), w2_ref[...],
                  preferred_element_type=jnp.float32)
    o_ref[...] = (out + b2_ref[...]).astype(o_ref.dtype)


def pack_params(params, zdim, compute_dtype=jnp.bfloat16):
    """One-time prep: split W1 by (z, a) rows, bf16-cast the MXU weights, and
    zero-pad only the hidden dim to 128 lanes (output dim stays narrow)."""
    w1, b1, w2, b2 = params
    hidden = w1.shape[1]
    out_dim = w2.shape[1]
    hp = _round_up(hidden, _LANE)

    w1z = jnp.zeros((zdim, hp), compute_dtype).at[:, :hidden].set(
        w1[:zdim].astype(compute_dtype))
    # W1a is used on the VPU only -> keep f32 (tiny: nu x Hp).
    w1a = jnp.zeros((w1.shape[0] - zdim, hp), jnp.float32).at[:, :hidden].set(
        w1[zdim:].astype(jnp.float32))
    b1p = jnp.zeros((1, hp), jnp.float32).at[:, :hidden].set(b1.astype(jnp.float32))
    w2p = jnp.zeros((hp, out_dim), compute_dtype).at[:hidden, :].set(
        w2.astype(compute_dtype))
    b2p = b2.astype(jnp.float32).reshape(1, out_dim)
    return (w1z, w1a, b1p, w2p, b2p)


@functools.partial(jax.jit, static_argnames=("tile_b",))
def latent_wrapper_forward(z, a, packed, *, tile_b=512):
    """Pallas implementation of LatentWrapper.forward(z, a) == latent(z, a, detach=False)."""
    w1z, w1a, b1p, w2p, b2p = packed
    B, zdim = z.shape
    nu = a.shape[1]
    out_dim = w2p.shape[1]

    # Tile choice: largest tile <= tile_b that minimizes tail waste, and >=2 grid
    # steps whenever B allows so the "parallel" axis can use both v7x TensorCores.
    n_tiles = max(pl.cdiv(B, tile_b), min(2, pl.cdiv(B, _SUBLANE)))
    tb = min(_round_up(pl.cdiv(B, n_tiles), _SUBLANE), _round_up(B, _SUBLANE))
    grid = (pl.cdiv(B, tb),)

    def const_spec(arr):  # weights/biases: same block every step -> VMEM-resident
        return pl.BlockSpec(arr.shape, lambda i: (0, 0))

    # Ragged last batch block: Pallas only writes in-bounds output rows, so no
    # wrapper pad/slice is needed and out_shape is exactly (B, out_dim).
    out = pl.pallas_call(
        _latent_mlp_kernel,
        out_shape=jax.ShapeDtypeStruct((B, out_dim), z.dtype),
        grid=grid,
        in_specs=[
            pl.BlockSpec((tb, zdim), lambda i: (i, 0)),
            pl.BlockSpec((tb, nu), lambda i: (i, 0)),
            const_spec(w1z),
            const_spec(w1a),
            const_spec(b1p),
            const_spec(w2p),
            const_spec(b2p),
        ],
        out_specs=pl.BlockSpec((tb, out_dim), lambda i: (i, 0)),
        compiler_params=pltpu.CompilerParams(
            dimension_semantics=("parallel",)),
    )(z, a, w1z, w1a, b1p, w2p, b2p)
    return out


def init_params(key, zdim, adim, hidden, dtype=jnp.float32):
    k1, k2, k3, k4 = jax.random.split(key, 4)
    # Deterministic, small-scale init (stand-in for the latent module's weights).
    w1 = jax.random.normal(k1, (zdim + adim, hidden), dtype) * 0.1
    b1 = jax.random.normal(k2, (1, hidden), dtype) * 0.01
    w2 = jax.random.normal(k3, (hidden, zdim), dtype) * 0.1
    b2 = jax.random.normal(k4, (1, zdim), dtype) * 0.01
    return (w1, b1, w2, b2)


def _reference(z, a, params):
    w1, b1, w2, b2 = params
    za = jnp.concatenate([z, a], axis=-1)
    h = jnp.maximum(za @ w1 + b1, 0.0)
    return h @ w2 + b2


if __name__ == "__main__":
    B, ZDIM, HIDDEN = 8, 32, 64
    NU = 2  # LatentWrapper.__init__ sets self.nu = 2 -> action dim

    key = jax.random.PRNGKey(0)
    kz, ka, kp = jax.random.split(key, 3)
    z = jax.random.normal(kz, (B, ZDIM), jnp.float32)
    a = jax.random.normal(ka, (B, NU), jnp.float32)
    params = init_params(kp, ZDIM, NU, HIDDEN)

    packed = pack_params(params, ZDIM)

    out = latent_wrapper_forward(z, a, packed)
    out = jax.block_until_ready(out)

    ref = _reference(z, a, params)
    assert out.shape == (B, ZDIM), f"bad shape {out.shape}"
    # bf16 MXU operands (by design, per perf review) -> looser tolerance vs f32 ref.
    assert jnp.allclose(out, ref, atol=2e-2, rtol=2e-2), "mismatch vs JAX reference"

    print("KERNEL_OK")
</pallas_src>

<mosaic_0001>
module attributes {stable_mosaic.version = 11 : i64} {
  func.func @_latent_mlp_kernel(%arg0: i32, %arg1: memref<8x32xf32, #tpu.memory_space<vmem>>, %arg2: memref<8x2xf32, #tpu.memory_space<vmem>>, %arg3: memref<32x128xbf16, #tpu.memory_space<vmem>>, %arg4: memref<2x128xf32, #tpu.memory_space<vmem>>, %arg5: memref<1x128xf32, #tpu.memory_space<vmem>>, %arg6: memref<128x32xbf16, #tpu.memory_space<vmem>>, %arg7: memref<1x32xf32, #tpu.memory_space<vmem>>, %arg8: memref<8x32xf32, #tpu.memory_space<vmem>>) attributes {dimension_semantics = [#tpu.dimension_semantics<parallel>], iteration_bounds = array<i64: 1>, scalar_prefetch = 0 : i64, scratch_operands = 0 : i64, tpu.core_type = #tpu.core_type<tc>, window_params = [{transform_indices = @transform_0, window_bounds = array<i64: 8, 32>}, {transform_indices = @transform_1, window_bounds = array<i64: 8, 2>}, {pipeline_mode = #tpu.pipeline_mode<synchronous>, transform_indices = @transform_2, window_bounds = array<i64: 32, 128>}, {pipeline_mode = #tpu.pipeline_mode<synchronous>, transform_indices = @transform_3, window_bounds = array<i64: 2, 128>}, {pipeline_mode = #tpu.pipeline_mode<synchronous>, transform_indices = @transform_4, window_bounds = array<i64: 1, 128>}, {pipeline_mode = #tpu.pipeline_mode<synchronous>, transform_indices = @transform_5, window_bounds = array<i64: 128, 32>}, {pipeline_mode = #tpu.pipeline_mode<synchronous>, transform_indices = @transform_6, window_bounds = array<i64: 1, 32>}, {transform_indices = @transform_7, window_bounds = array<i64: 8, 32>}]} {
    %c0 = arith.constant 0 : index
    %c0_0 = arith.constant 0 : index
    %0 = vector.load %arg1[%c0, %c0_0] : memref<8x32xf32, #tpu.memory_space<vmem>>, vector<8x32xf32>
    %1 = arith.truncf %0 : vector<8x32xf32> to vector<8x32xbf16>
    %c0_1 = arith.constant 0 : index
    %c0_2 = arith.constant 0 : index
    %2 = vector.load %arg3[%c0_1, %c0_2] : memref<32x128xbf16, #tpu.memory_space<vmem>>, vector<32x128xbf16>
    %cst = arith.constant dense<0.000000e+00> : vector<8x128xf32>
    %3 = tpu.matmul %1, %2, %cst {dimension_numbers = #tpu.dot_dimension_numbers<[1], [0], [0], [1], [0, 0, 1, 1], [], []>} : vector<8x32xbf16>, vector<32x128xbf16>, vector<8x128xf32> -> vector<8x128xf32>
    %c0_3 = arith.constant 0 : index
    %c0_4 = arith.constant 0 : index
    %4 = vector.load %arg2[%c0_3, %c0_4] : memref<8x2xf32, #tpu.memory_space<vmem>>, vector<8x2xf32>
    %5 = vector.extract_strided_slice %4 {offsets = [0, 0], sizes = [8, 1], strides = [1, 1]} : vector<8x2xf32> to vector<8x1xf32>
    %c0_5 = arith.constant 0 : index
    %c0_6 = arith.constant 0 : index
    %6 = vector.load %arg4[%c0_5, %c0_6] : memref<2x128xf32, #tpu.memory_space<vmem>>, vector<1x128xf32>
    %7 = vector.broadcast %5 : vector<8x1xf32> to vector<8x128xf32>
    %8 = vector.broadcast %6 : vector<1x128xf32> to vector<8x128xf32>
    %9 = arith.mulf %7, %8 : vector<8x128xf32>
    %10 = arith.addf %3, %9 : vector<8x128xf32>
    %11 = vector.extract_strided_slice %4 {offsets = [0, 1], sizes = [8, 1], strides = [1, 1]} : vector<8x2xf32> to vector<8x1xf32>
    %c1 = arith.constant 1 : index
    %c0_7 = arith.constant 0 : index
    %12 = vector.load %arg4[%c1, %c0_7] : memref<2x128xf32, #tpu.memory_space<vmem>>, vector<1x128xf32>
    %13 = vector.broadcast %11 : vector<8x1xf32> to vector<8x128xf32>
    %14 = vector.broadcast %12 : vector<1x128xf32> to vector<8x128xf32>
    %15 = arith.mulf %13, %14 : vector<8x128xf32>
    %16 = arith.addf %10, %15 : vector<8x128xf32>
    %c0_8 = arith.constant 0 : index
    %c0_9 = arith.constant 0 : index
    %17 = vector.load %arg5[%c0_8, %c0_9] : memref<1x128xf32, #tpu.memory_space<vmem>>, vector<1x128xf32>
    %18 = vector.broadcast %17 : vector<1x128xf32> to vector<8x128xf32>
    %19 = arith.addf %16, %18 : vector<8x128xf32>
    %cst_10 = arith.constant 0.000000e+00 : f32
    %20 = vector.broadcast %cst_10 : f32 to vector<8x128xf32>
    %21 = arith.maximumf %19, %20 : vector<8x128xf32>
    %22 = arith.truncf %21 : vector<8x128xf32> to vector<8x128xbf16>
    %c0_11 = arith.constant 0 : index
    %c0_12 = arith.constant 0 : index
    %23 = vector.load %arg6[%c0_11, %c0_12] : memref<128x32xbf16, #tpu.memory_space<vmem>>, vector<128x32xbf16>
    %cst_13 = arith.constant dense<0.000000e+00> : vector<8x32xf32>
    %24 = tpu.matmul %22, %23, %cst_13 {dimension_numbers = #tpu.dot_dimension_numbers<[1], [0], [0], [1], [0, 0, 1, 1], [], []>} : vector<8x128xbf16>, vector<128x32xbf16>, vector<8x32xf32> -> vector<8x32xf32>
    %c0_14 = arith.constant 0 : index
    %c0_15 = arith.constant 0 : index
    %25 = vector.load %arg7[%c0_14, %c0_15] : memref<1x32xf32, #tpu.memory_space<vmem>>, vector<1x32xf32>
    %26 = vector.broadcast %25 : vector<1x32xf32> to vector<8x32xf32>
    %27 = arith.addf %24, %26 : vector<8x32xf32>
    %c0_16 = arith.constant 0 : index
    %c0_17 = arith.constant 0 : index
    %28 = vector.load %arg8[%c0_16, %c0_17] : memref<8x32xf32, #tpu.memory_space<vmem>>, vector<8x32xf32>
    tpu.vector_store %arg8[%c0_16, %c0_17], %27 {strides = array<i32>} : memref<8x32xf32, #tpu.memory_space<vmem>>, vector<8x32xf32>,
    return
  }
  func.func @transform_0(%arg0: i32) -> (i32, i32) {
    %c0_i32 = arith.constant 0 : i32
    %c0_i32_0 = arith.constant 0 : i32
    return %arg0, %c0_i32 : i32, i32
  }
  func.func @transform_1(%arg0: i32) -> (i32, i32) {
    %c0_i32 = arith.constant 0 : i32
    %c0_i32_0 = arith.constant 0 : i32
    return %arg0, %c0_i32 : i32, i32
  }
  func.func @transform_2(%arg0: i32) -> (i32, i32) {
    %c0_i32 = arith.constant 0 : i32
    %c0_i32_0 = arith.constant 0 : i32
    %c0_i32_1 = arith.constant 0 : i32
    return %c0_i32, %c0_i32_0 : i32, i32
  }
  func.func @transform_3(%arg0: i32) -> (i32, i32) {
    %c0_i32 = arith.constant 0 : i32
    %c0_i32_0 = arith.constant 0 : i32
    %c0_i32_1 = arith.constant 0 : i32
    return %c0_i32, %c0_i32_0 : i32, i32
  }
  func.func @transform_4(%arg0: i32) -> (i32, i32) {
    %c0_i32 = arith.constant 0 : i32
    %c0_i32_0 = arith.constant 0 : i32
    %c0_i32_1 = arith.constant 0 : i32
    return %c0_i32, %c0_i32_0 : i32, i32
  }
  func.func @transform_5(%arg0: i32) -> (i32, i32) {
    %c0_i32 = arith.constant 0 : i32
    %c0_i32_0 = arith.constant 0 : i32
    %c0_i32_1 = arith.constant 0 : i32
    return %c0_i32, %c0_i32_0 : i32, i32
  }
  func.func @transform_6(%arg0: i32) -> (i32, i32) {
    %c0_i32 = arith.constant 0 : i32
    %c0_i32_0 = arith.constant 0 : i32
    %c0_i32_1 = arith.constant 0 : i32
    return %c0_i32, %c0_i32_0 : i32, i32
  }
  func.func @transform_7(%arg0: i32) -> (i32, i32) {
    %c0_i32 = arith.constant 0 : i32
    %c0_i32_0 = arith.constant 0 : i32
    return %arg0, %c0_i32 : i32, i32
  }
}

</mosaic_0001>

<llo_original>
// kernel: latent_wrapper_forward.1
$region0: #{latent_wrapper_forward.1}
  #allocation0 [shape = 'u32[]', space=smem, size = 0x4, offset = 0x4, fixed_abs, tag = 'smem constant byte address 0x4 - core index']
  #allocation1 [shape = 'u32[72,128]{1,0:T(1,128)}', space=vmem, size = 0x9000, scoped, tag = 'internal scratch']
  %s0 = inlined_call_operand.vmem [shape: f32[8,32], index: 0, kind: input, shape index: {}]
  %s1 = inlined_call_operand.vmem [shape: f32[8,2], index: 1, kind: input, shape index: {}]
  %s2 = inlined_call_operand.vmem [shape: bf16[32,128], index: 2, kind: input, shape index: {}]
  %s3 = inlined_call_operand.vmem [shape: f32[2,128], index: 3, kind: input, shape index: {}]
  %s4 = inlined_call_operand.vmem [shape: f32[1,128], index: 4, kind: input, shape index: {}]
  %s5 = inlined_call_operand.vmem [shape: bf16[128,32], index: 5, kind: input, shape index: {}]
  %s6 = inlined_call_operand.vmem [shape: f32[1,32], index: 6, kind: input, shape index: {}]
  %s7 = inlined_call_operand.hbm [shape: f32[8,32], index: 7, kind: output, shape index: {}]
  %s8 = sld [smem:[#allocation0]]
  $region38: #{latent_wrapper_forward.1} parent=0
    _
  %s10 = ssub.s32 1, %s8
  %s11 = scalar_select 0, %s10, %s8
  $region1: #{latent_wrapper_forward.1} parent=0
    #allocation2 [shape = 'u8[4096]{0}', space=vmem, size = 0x1000, scoped, tag = 'output window, operand 0, single buffered']
    #allocation3 [shape = 's32[1]{0}', space=sflag, size = 0x4, scoped, tag = 'scoped memory for latent_wrapper_forward.1']
    %12 = vsyncpa [#allocation3], 0
    // Predicated region
    $region2: #{latent_wrapper_forward.1} parent=1 // pred_check
      _
    $region3: #{latent_wrapper_forward.1} parent=1 // pred_check_branch
      %14 = sbr.rel (0) target = $region5
    $region4: #{latent_wrapper_forward.1} parent=1 // pred_region
      _
    $region5: #{latent_wrapper_forward.1} parent=1 // pred_fallthru
      _
    // Predicated region
    $region6: #{latent_wrapper_forward.1} parent=1 // pred_check
      _
    $region7: #{latent_wrapper_forward.1} parent=1 // pred_check_branch
      %16 = sbr.rel (0) target = $region9
    $region8: #{latent_wrapper_forward.1} parent=1 // pred_region
      _
    $region9: #{latent_wrapper_forward.1} parent=1 // pred_fallthru
      _
    // Predicated region
    $region10: #{latent_wrapper_forward.1} parent=1 // pred_check
      _
    $region11: #{latent_wrapper_forward.1} parent=1 // pred_check_branch
      %18 = sbr.rel (0) target = $region13
    $region12: #{latent_wrapper_forward.1} parent=1 // pred_region
      _
    $region13: #{latent_wrapper_forward.1} parent=1 // pred_fallthru
      _
    // Predicated region
    $region14: #{latent_wrapper_forward.1} parent=1 // pred_check
      _
    $region15: #{latent_wrapper_forward.1} parent=1 // pred_check_branch
      %20 = sbr.rel (0) target = $region17
    $region16: #{latent_wrapper_forward.1} parent=1 // pred_region
      _
    $region17: #{latent_wrapper_forward.1} parent=1 // pred_fallthru
      _
    // Predicated region
    $region18: #{latent_wrapper_forward.1} parent=1 // pred_check
      _
    $region19: #{latent_wrapper_forward.1} parent=1 // pred_check_branch
      %22 = sbr.rel (0) target = $region21
    $region20: #{latent_wrapper_forward.1} parent=1 // pred_region
      _
    $region21: #{latent_wrapper_forward.1} parent=1 // pred_fallthru
      _
    // Predicated region
    $region22: #{latent_wrapper_forward.1} parent=1 // pred_check
      _
    $region23: #{latent_wrapper_forward.1} parent=1 // pred_check_branch
      %24 = sbr.rel (0) target = $region25
    $region24: #{latent_wrapper_forward.1} parent=1 // pred_region
      _
    $region25: #{latent_wrapper_forward.1} parent=1 // pred_fallthru
      _
    // Predicated region
    $region26: #{latent_wrapper_forward.1} parent=1 // pred_check
      _
    $region27: #{latent_wrapper_forward.1} parent=1 // pred_check_branch
      %26 = sbr.rel (0) target = $region29
    $region28: #{latent_wrapper_forward.1} parent=1 // pred_region
      _
    $region29: #{latent_wrapper_forward.1} parent=1 // pred_fallthru
      _
    %v28 = vld [vmem:[%s0] sm:$0xff]
    %v29 = vpack.c.bf16 %v28, %v28
    %v30 = vld [vmem:[%s2] sm:$0xf]
    %v31 = vld [vmem:[%s2 + $0x4] sm:$0xf]
    %v32 = vld [vmem:[%s2 + $0x8] sm:$0xf]
    %v33 = vld [vmem:[%s2 + $0xc] sm:$0xf]
    %v34 = vld [vmem:[%s1] sm:$0xff]
    %v35 = vld [vmem:[%s3] sm:$0x1]
    %37 = vset.pattern.permute.xlu0 0
    %38 = vperm.xlu0 %37, %v34
    %v39 = vpop.permute.xlu0 %38
    %v41 = vperm.slane %v35, 0
    %v42 = vmul.f32 %v39, %v41
    %v47 = vunpack.c.l.b16 %v30
    %v48 = vunpack.c.l.b16 %v31
    %v49 = vunpack.c.l.b16 %v32
    %v50 = vunpack.c.l.b16 %v33
    %v51 = vpack.c.b16 %v48, %v47
    %v52 = vpack.c.b16 %v50, %v49
    %vm55 = vcmask 261120
    %v57 = vsel %vm55, %v29, 0
    %59 = vmatpush.bf16.msra.mxu0 0
    %60 = vmatpush.bf16.msra.mxu0 0
    %61 = vmatpush.bf16.msra.mxu0 0
    %62 = vmatpush.bf16.msra.mxu0 0
    %63 = vmatpush.bf16.msra.mxu0 0
    %64 = vmatpush.bf16.msra.mxu0 0
    %65 = vmatpush.bf16.msra.mxu0 %v52
    %66 = vmatpush.bf16.msra.mxu0 %v51
    %67 = vmatmul.bf16.gmra.mxu0 %v57
    %v68 = vpop.f32.mrf.mxu0
    %v69 = vadd.f32 %v42, %v68
    %v70 = vpop.f32.mrf.mxu0
    %71 = vdwg.mxu0
    %v72 = vld [vmem:[%s3 + $0x1] sm:$0x1]
    %73 = vset.pattern.permute.xlu0 1
    %74 = vperm.xlu0 %73, %v34
    %v75 = vpop.permute.xlu0 %74
    %v77 = vperm.slane %v72, 0
    %v78 = vmul.f32 %v75, %v77
    %v79 = vadd.f32 %v69, %v78
    %v80 = vld [vmem:[%s4] sm:$0x1]
    %v82 = vperm.slane %v80, 0
    %v84 = vadd.f32 %v79, %v82
    %v85 = vmax.f32 %v84, 0.0
    %v86 = vpack.c.bf16 %v85, %v85
    %v87 = vld [vmem:[%s5] sm:$0xf]
    %v88 = vld [vmem:[%s5 + $0x4] sm:$0xf]
    %v89 = vld [vmem:[%s5 + $0x8] sm:$0xf]
    %v90 = vld [vmem:[%s5 + $0xc] sm:$0xf]
    %v91 = vld [vmem:[%s5 + $0x10] sm:$0xf]
    %v92 = vld [vmem:[%s5 + $0x14] sm:$0xf]
    %v93 = vld [vmem:[%s5 + $0x18] sm:$0xf]
    %v94 = vld [vmem:[%s5 + $0x1c] sm:$0xf]
    %v95 = vld [vmem:[%s5 + $0x20] sm:$0xf]
    %v96 = vld [vmem:[%s5 + $0x24] sm:$0xf]
    %v97 = vld [vmem:[%s5 + $0x28] sm:$0xf]
    %v98 = vld [vmem:[%s5 + $0x2c] sm:$0xf]
    %v99 = vld [vmem:[%s5 + $0x30] sm:$0xf]
    %v100 = vld [vmem:[%s5 + $0x34] sm:$0xf]
    %v101 = vld [vmem:[%s5 + $0x38] sm:$0xf]
    %v102 = vld [vmem:[%s5 + $0x3c] sm:$0xf]
    %v103 = vld [vmem:[%s6] sm:$0x1]
    %v105 = vperm.slane %v103, 0
    %v123 = vunpack.c.l.b16 %v87
    %v124 = vunpack.c.l.b16 %v88
    %v125 = vunpack.c.l.b16 %v89
    %v126 = vunpack.c.l.b16 %v90
    %v127 = vunpack.c.l.b16 %v91
    %v128 = vunpack.c.l.b16 %v92
    %v129 = vunpack.c.l.b16 %v93
    %v130 = vunpack.c.l.b16 %v94
    %v131 = vunpack.c.l.b16 %v95
    %v132 = vunpack.c.l.b16 %v96
    %v133 = vunpack.c.l.b16 %v97
    %v134 = vunpack.c.l.b16 %v98
    %v135 = vunpack.c.l.b16 %v99
    %v136 = vunpack.c.l.b16 %v100
    %v137 = vunpack.c.l.b16 %v101
    %v138 = vunpack.c.l.b16 %v102
    %v139 = vpack.c.b16 %v124, %v123
    %v140 = vpack.c.b16 %v126, %v125
    %v141 = vpack.c.b16 %v128, %v127
    %v142 = vpack.c.b16 %v130, %v129
    %v143 = vpack.c.b16 %v132, %v131
    %v144 = vpack.c.b16 %v134, %v133
    %v145 = vpack.c.b16 %v136, %v135
    %v146 = vpack.c.b16 %v138, %v137
    %155 = vmatpush.bf16.msra.mxu0 %v146
    %156 = vmatpush.bf16.msra.mxu0 %v145
    %157 = vmatpush.bf16.msra.mxu0 %v144
    %158 = vmatpush.bf16.msra.mxu0 %v143
    %159 = vmatpush.bf16.msra.mxu0 %v142
    %160 = vmatpush.bf16.msra.mxu0 %v141
    %161 = vmatpush.bf16.msra.mxu0 %v140
    %162 = vmatpush.bf16.msra.mxu0 %v139
    %163 = vmatmul.bf16.gmra.mxu0 %v86
    %v164 = vpop.f32.mrf.mxu0
    %v165 = vadd.f32 %v105, %v164
    %v166 = vpop.f32.mrf.mxu0
    %167 = vdwg.mxu0
    %168 = vst.msk [vmem:[#allocation2] sm:$0xff] %vm55, %v165
    // Predicated region
    $region30: #{latent_wrapper_forward.1} parent=1 // pred_check
      _
    $region31: #{latent_wrapper_forward.1} parent=1 // pred_check_branch
      %170 = sbr.rel (0) target = $region33
    $region32: #{latent_wrapper_forward.1} parent=1 // pred_region
      %172 = vsyncadd [#allocation3], 0
      %s174 = sshll.u32 [#allocation2], 4
      %s175 = int_to_ptr.vmem [resolvable:$true] %s174
      %s176 = sshll.u32 %s7, 4
      %s177 = int_to_ptr.hbm [resolvable:$true] %s176
      %179 = dma.vmem_to_hbm [thread:$0]  %s175, 128, %s177, [#allocation3]
    $region33: #{latent_wrapper_forward.1} parent=1 // pred_fallthru
      _
    // Predicated region
    $region34: #{latent_wrapper_forward.1} parent=1 // pred_check
      _
    $region35: #{latent_wrapper_forward.1} parent=1 // pred_check_branch
      %181 = sbr.rel (0) target = $region37
    $region36: #{latent_wrapper_forward.1} parent=1 // pred_region
      %183 = dma.done [#allocation3], 128
    $region37: #{latent_wrapper_forward.1} parent=1 // pred_fallthru
      _
    %184 = vsyncpa [#allocation3], 1

</llo_original>
